<compile_context>
chip_gen: v6e
topology: v6e:2x2x1
jax: 0.10.0
libtpu: 0.0.40
codegen_flags: <defaults>
</compile_context>

<pallas_src>
import jax
import jax.numpy as jnp
from jax.experimental import pallas as pl
from jax.experimental.pallas import tpu as pltpu


# ---------------------------------------------------------------------------
# Kernel
# ---------------------------------------------------------------------------
def rope_kernel(cos_ref, sin_ref, x_ref, o_ref):
    """out = x * [cos,cos] + rotate_half(x) * [-sin,sin]."""
    x = x_ref[...].astype(jnp.float32)                  # (kb, tr, D), f32 math
    d2 = x.shape[-1] // 2
    # rotate_half(x) = [x2, x1].  D=96 is not a multiple of 128, so
    # pltpu.roll is not applicable; two static lane slices + concat lower fine.
    x_rot = jnp.concatenate([x[..., d2:], x[..., :d2]], axis=-1)
    cos = cos_ref[...][None, :, :]                      # (1, tr, D) -> bcast kb
    sin = sin_ref[...][None, :, :]
    o_ref[...] = (x * cos + x_rot * sin).astype(o_ref.dtype)


# ---------------------------------------------------------------------------
# One-time table construction (mirrors Rope.__init__, hoisted out of forward)
# ---------------------------------------------------------------------------
def make_rope_tables(max_t=1024, d_half=48):
    theta = 10000.0 ** (-jnp.arange(0, d_half, dtype=jnp.float32) / d_half)
    pos = jnp.arange(max_t, dtype=jnp.float32)[:, None]
    ang = pos * theta                                   # (max_t, d_half)
    sin, cos = jnp.sin(ang), jnp.cos(ang)
    cos_full = jnp.concatenate([cos, cos], axis=-1)     # (max_t, D)
    sin_signed = jnp.concatenate([-sin, sin], axis=-1)  # (max_t, D)
    return cos_full, sin_signed


# ---------------------------------------------------------------------------
# Tile selection
# ---------------------------------------------------------------------------
def _pick_tiles(B, T, itemsize, *, target_rows=1024, min_grid=4):
    """Choose (kb, tr): x/out block = (kb, tr, D), grid = (B//kb, T//tr).

    Goals (from the perf review):
      * >= min_grid grid steps so the BlockSpec pipeline reaches steady state
        and both v7x TensorCores get work,
      * block row count (kb * tr) near target_rows (512-2048 sweet spot),
      * tr a multiple of the sublane packing (8 for 4-byte dtypes, 16 for
        2-byte dtypes) or equal to the full T extent,
      * among ties prefer the largest tr (full-T tiles keep the table block
        index constant -> resident, single-bufferable tables).
    """
    sub = 16 if itemsize == 2 else 8
    trs = sorted({d for d in range(sub, T + 1, sub) if T % d == 0} | {T})
    kbs = [d for d in range(1, B + 1) if B % d == 0]

    best, best_key = None, None
    for tr in trs:
        for kb in kbs:
            rows = kb * tr
            steps = (B // kb) * (T // tr)
            key = (min(steps, min_grid), -abs(rows - target_rows), tr)
            if best_key is None or key > best_key:
                best, best_key = (kb, tr), key
    return best


# ---------------------------------------------------------------------------
# Forward wrapper
# ---------------------------------------------------------------------------
def rope_forward(x, cos_full, sin_signed, *, target_rows=1024, min_grid=4):
    """Apply RoPE.  cos_full/sin_signed are the precomputed (max_t, D) tables.

    Note: for tiny problems (a few dozen rows total) plain XLA is cheaper than
    launching a Pallas grid; this wrapper still runs the kernel so the demo
    exercises it.
    """
    B, T, D = x.shape
    max_t, Dt = cos_full.shape
    assert D % 2 == 0 and Dt == D and sin_signed.shape == (max_t, D)
    assert T <= max_t, "sequence longer than precomputed table"

    itemsize = jnp.dtype(x.dtype).itemsize
    kb, tr = _pick_tiles(B, T, itemsize,
                         target_rows=target_rows, min_grid=min_grid)
    grid = (B // kb, T // tr)
    table_resident = (grid[1] == 1)   # table block index constant across grid

    sub = 16 if itemsize == 2 else 8
    if tr % sub != 0:
        # Rare ragged case (tr == T, T not a sublane multiple): slice the table
        # so its block equals the full array dims ((8,128) rule escape hatch).
        cos_full, sin_signed = cos_full[:T], sin_signed[:T]

    # Advisory cost: 3 flops / element, 2 streams of x-sized data + tables.
    cost = pl.CostEstimate(
        flops=3 * B * T * D,
        transcendentals=0,
        bytes_accessed=2 * B * T * D * itemsize + 2 * T * D * 4,
    )

    def _call(single_buffer_tables):
        table_kw = (
            dict(pipeline_mode=pl.Buffered(1)) if single_buffer_tables else {}
        )
        cos_spec = pl.BlockSpec((tr, D), lambda i, j: (j, 0), **table_kw)
        sin_spec = pl.BlockSpec((tr, D), lambda i, j: (j, 0), **table_kw)
        x_spec = pl.BlockSpec((kb, tr, D), lambda i, j: (i, j, 0))
        out_spec = pl.BlockSpec((kb, tr, D), lambda i, j: (i, j, 0))

        # Only override the scoped-VMEM limit if the blocks would threaten
        # v5e's 16 MiB default (x + out double-buffered, plus tables).
        tbl_bufs = 1 if single_buffer_tables else 2
        vmem_est = (2 * 2 * kb * tr * D * itemsize
                    + 2 * tbl_bufs * tr * D * 4)
        vmem_limit = None
        if vmem_est > 12 * 1024 * 1024:
            vmem_limit = min(2 * vmem_est + (4 << 20), 64 * 1024 * 1024)

        return pl.pallas_call(
            rope_kernel,
            out_shape=jax.ShapeDtypeStruct((B, T, D), x.dtype),
            grid_spec=pltpu.PrefetchScalarGridSpec(
                num_scalar_prefetch=0,
                grid=grid,
                in_specs=[cos_spec, sin_spec, x_spec],
                out_specs=out_spec,
            ),
            compiler_params=pltpu.CompilerParams(
                dimension_semantics=("parallel", "parallel"),
                vmem_limit_bytes=vmem_limit,
            ),
            cost_estimate=cost,
        )(cos_full, sin_signed, x)

    if table_resident:
        try:
            return _call(True)
        except Exception:
            # pl.Buffered(1) not supported by this jax version; fall back to
            # default double-buffered table blocks (numerically identical,
            # tables are tiny so the VMEM cost is negligible).
            pass
    return _call(False)


# ---------------------------------------------------------------------------
# Pure-JAX reference (mirrors the PyTorch module)
# ---------------------------------------------------------------------------
def rope_reference(x, cos_full, sin_signed):
    B, T, D = x.shape
    d2 = D // 2
    cos = cos_full[:T, :d2]
    sin = sin_signed[:T, d2:]
    x1, x2 = x[..., :d2], x[..., d2:]
    return jnp.concatenate([x1 * cos - x2 * sin, x1 * sin + x2 * cos], axis=-1)


# ---------------------------------------------------------------------------
# Demo / self-test
# ---------------------------------------------------------------------------
if __name__ == "__main__":
    max_t, d_half = 1024, 48
    D = 2 * d_half                                     # 96

    cos_full, sin_signed = make_rope_tables(max_t=max_t, d_half=d_half)

    key = jax.random.PRNGKey(0)
    k1, k2, k3 = jax.random.split(key, 3)

    # Case 1: small module-default shape, f32.  grid=(2,2): tables follow the
    # T tile (non-resident path), 4 grid steps.
    x1 = jax.random.normal(k1, (2, 16, D), dtype=jnp.float32)
    out1 = jax.block_until_ready(rope_forward(x1, cos_full, sin_signed))
    ref1 = rope_reference(x1, cos_full, sin_signed)
    assert out1.shape == x1.shape
    assert jnp.allclose(out1, ref1, atol=1e-5, rtol=1e-5)

    # Case 2: more batch, full-T tile -> grid=(4,1): resident / single-buffered
    # table path.
    x2 = jax.random.normal(k2, (16, 64, D), dtype=jnp.float32)
    out2 = jax.block_until_ready(rope_forward(x2, cos_full, sin_signed))
    ref2 = rope_reference(x2, cos_full, sin_signed)
    assert jnp.allclose(out2, ref2, atol=1e-5, rtol=1e-5)

    # Case 3: bf16 activations (f32 compute inside the kernel, bf16 store),
    # exercises the 16-sublane divisibility path.
    x3 = jax.random.normal(k3, (2, 16, D), dtype=jnp.float32).astype(jnp.bfloat16)
    out3 = jax.block_until_ready(rope_forward(x3, cos_full, sin_signed))
    ref3 = rope_reference(x3.astype(jnp.float32), cos_full, sin_signed)
    assert jnp.allclose(out3.astype(jnp.float32), ref3, atol=2e-2, rtol=2e-2)

    print("KERNEL_OK")
</pallas_src>

<mosaic_0001>
module attributes {stable_mosaic.version = 11 : i64} {
  func.func @rope_kernel(%arg0: i32, %arg1: i32, %arg2: memref<8x96xf32, #tpu.memory_space<vmem>>, %arg3: memref<8x96xf32, #tpu.memory_space<vmem>>, %arg4: memref<1x8x96xf32, #tpu.memory_space<vmem>>, %arg5: memref<1x8x96xf32, #tpu.memory_space<vmem>>) attributes {dimension_semantics = [#tpu.dimension_semantics<parallel>, #tpu.dimension_semantics<parallel>], iteration_bounds = array<i64: 2, 2>, scalar_prefetch = 0 : i64, scratch_operands = 0 : i64, tpu.core_type = #tpu.core_type<tc>, window_params = [{transform_indices = @transform_0, window_bounds = array<i64: 8, 96>}, {transform_indices = @transform_1, window_bounds = array<i64: 8, 96>}, {transform_indices = @transform_2, window_bounds = array<i64: 1, 8, 96>}, {transform_indices = @transform_3, window_bounds = array<i64: 1, 8, 96>}]} {
    %c0 = arith.constant 0 : index
    %c0_0 = arith.constant 0 : index
    %c0_1 = arith.constant 0 : index
    %0 = vector.load %arg4[%c0, %c0_0, %c0_1] : memref<1x8x96xf32, #tpu.memory_space<vmem>>, vector<1x8x96xf32>
    %1 = vector.extract_strided_slice %0 {offsets = [0, 0, 48], sizes = [1, 8, 48], strides = [1, 1, 1]} : vector<1x8x96xf32> to vector<1x8x48xf32>
    %2 = vector.extract_strided_slice %0 {offsets = [0, 0, 0], sizes = [1, 8, 48], strides = [1, 1, 1]} : vector<1x8x96xf32> to vector<1x8x48xf32>
    %3 = tpu.concatenate %1, %2 in 2 : vector<1x8x48xf32>, vector<1x8x48xf32> -> vector<1x8x96xf32>
    %c0_2 = arith.constant 0 : index
    %c0_3 = arith.constant 0 : index
    %4 = vector.load %arg2[%c0_2, %c0_3] : memref<8x96xf32, #tpu.memory_space<vmem>>, vector<8x96xf32>
    %5 = vector.shape_cast %4 : vector<8x96xf32> to vector<1x8x96xf32>
    %c0_4 = arith.constant 0 : index
    %c0_5 = arith.constant 0 : index
    %6 = vector.load %arg3[%c0_4, %c0_5] : memref<8x96xf32, #tpu.memory_space<vmem>>, vector<8x96xf32>
    %7 = vector.shape_cast %6 : vector<8x96xf32> to vector<1x8x96xf32>
    %8 = arith.mulf %0, %5 : vector<1x8x96xf32>
    %9 = arith.mulf %3, %7 : vector<1x8x96xf32>
    %10 = arith.addf %8, %9 : vector<1x8x96xf32>
    %c0_6 = arith.constant 0 : index
    %c0_7 = arith.constant 0 : index
    %c0_8 = arith.constant 0 : index
    %11 = vector.load %arg5[%c0_6, %c0_7, %c0_8] : memref<1x8x96xf32, #tpu.memory_space<vmem>>, vector<1x8x96xf32>
    tpu.vector_store %arg5[%c0_6, %c0_7, %c0_8], %10 {strides = array<i32>} : memref<1x8x96xf32, #tpu.memory_space<vmem>>, vector<1x8x96xf32>,
    return
  }
  func.func @transform_0(%arg0: i32, %arg1: i32) -> (i32, i32) {
    %c0_i32 = arith.constant 0 : i32
    %c0_i32_0 = arith.constant 0 : i32
    return %arg1, %c0_i32 : i32, i32
  }
  func.func @transform_1(%arg0: i32, %arg1: i32) -> (i32, i32) {
    %c0_i32 = arith.constant 0 : i32
    %c0_i32_0 = arith.constant 0 : i32
    return %arg1, %c0_i32 : i32, i32
  }
  func.func @transform_2(%arg0: i32, %arg1: i32) -> (i32, i32, i32) {
    %c0_i32 = arith.constant 0 : i32
    %c0_i32_0 = arith.constant 0 : i32
    return %arg0, %arg1, %c0_i32 : i32, i32, i32
  }
  func.func @transform_3(%arg0: i32, %arg1: i32) -> (i32, i32, i32) {
    %c0_i32 = arith.constant 0 : i32
    %c0_i32_0 = arith.constant 0 : i32
    return %arg0, %arg1, %c0_i32 : i32, i32, i32
  }
}

</mosaic_0001>

<llo_original>
// kernel: tpu_custom_call.1
$region0: #{tpu_custom_call.1}
  #allocation0 [shape = 'u32[]', space=smem, size = 0x4, offset = 0x4, fixed_abs, tag = 'smem constant byte address 0x4 - core index']
  #allocation1 [shape = 'u32[144,128]{1,0:T(1,128)}', space=vmem, size = 0x12000, scoped, tag = 'internal scratch']
  %s0 = inlined_call_operand.vmem [shape: f32[1024,96], index: 0, kind: input, shape index: {}]
  %s1 = inlined_call_operand.vmem [shape: f32[1024,96], index: 1, kind: input, shape index: {}]
  %s2 = inlined_call_operand.vmem [shape: f32[2,16,96], index: 2, kind: input, shape index: {}]
  %s3 = inlined_call_operand.hbm [shape: f32[2,16,96], index: 3, kind: output, shape index: {}]
  %s4 = sld [smem:[#allocation0]]
  $region45: #{tpu_custom_call.1} parent=0
    _
  %s6 = ssub.s32 1, %s4
  %s7 = scalar_select 0, %s6, %s4
  $region1: #{tpu_custom_call.1} parent=0
    #allocation2 [shape = 'u8[8192]{0}', space=vmem, size = 0x2000, scoped, tag = 'output window, operand 0']
    #allocation3 [shape = 's32[2]{0}', space=sflag, size = 0x8, scoped, tag = 'scoped memory for tpu_custom_call.1']
    %8 = vsyncpa [#allocation3], 0
    %s9 = scalar_lea.sflag [#allocation3], 1
    %10 = vsyncpa %s9, 0
    loop: start=0, step=1, limit=6
    $region2: #{tpu_custom_call.1} parent=1 // loop_pre_header
      _
    $region3: #{tpu_custom_call.1} parent=1 // loop_header
      %s12 = sphi 0, %s16
      %p13 = scmp.ge.s32.totalorder %s12, 6
      %s19 = sphi 0, %s31
      %s20 = sphi 0, %s27
      %s21 = sphi 0, %s19
      %s22 = sphi 0, %s20
      %s23 = sphi 0, %s21
      %s24 = sphi 0, %s22
      %s34 = sphi 0, %s36
      %s37 = sphi 0, %s34
      %s38 = sphi 0, %s37
      %s54 = sphi 0, %s38
      %s60 = sphi 0, %s62
      %s63 = sphi 0, %s60
      %s64 = sphi 0, %s63
      %s80 = sphi 0, %s64
      %s88 = sphi 0, %s90
      %s91 = sphi 0, %s88
      %s92 = sphi 0, %s91
      %s108 = sphi 0, %s92
      %s116 = sphi 0, %s118
      %s119 = sphi 0, %s116
      %s120 = sphi 0, %s119
      %s136 = sphi 0, %s120
    $region4: #{tpu_custom_call.1} parent=1 // loop_header_branch
      %15 = sbr.rel (%p13) target = $region8
    $region5: #{tpu_custom_call.1} parent=1 // loop_body
      %s17 = ssub.s32 %s12, 1
      %s18 = ssub.s32 %s12, 2
      %s25 = sadd.s32 1, %s20
      %p26 = scmp.ge.s32.totalorder %s25, 2
      %s27 = scalar_select %p26, 0, %s25
      %s28 = sadd.s32 1, %s19
      %s29 = scalar_select %p26, %s28, %s19
      %p30 = scmp.ge.s32.totalorder %s29, 2
      %s31 = scalar_select %p30, 0, %s29
      %s32 = ssub.s32 %s20, %s27
      %p33 = scmp.eq.s32.totalorder %s32, 0
      %s35 = sadd.s32 %s34, 1
      %s36 = scalar_select %p33, %s34, %s35
      %p39 = pneg %p33
      %p40 = scmp.eq.s32.totalorder %s12, 3
      %p41 = por %p39, %p40
      %p42 = scmp.ne.s32.totalorder %s34, %s37
      %p43 = scmp.eq.s32.totalorder %s12, 0
      %p44 = por %p42, %p43
      %p45 = scmp.ne.s32.totalorder %s34, %s37
      %p46 = scmp.eq.s32.totalorder %s17, 3
      %p47 = por %p45, %p46
      %p48 = scmp.ne.s32.totalorder %s37, %s38
      %p49 = scmp.eq.s32.totalorder %s17, 0
      %p50 = por %p48, %p49
      %p51 = scmp.ne.s32.totalorder %s37, %s38
      %p52 = scmp.eq.s32.totalorder %s18, 3
      %p53 = por %p51, %p52
      %p55 = scmp.ne.s32.totalorder %s38, %s54
      %p56 = scmp.eq.s32.totalorder %s18, 0
      %p57 = por %p55, %p56
      %s58 = ssub.s32 %s20, %s27
      %p59 = scmp.eq.s32.totalorder %s58, 0
      %s61 = sadd.s32 %s60, 1
      %s62 = scalar_select %p59, %s60, %s61
      %p65 = pneg %p59
      %p66 = scmp.eq.s32.totalorder %s12, 3
      %p67 = por %p65, %p66
      %p68 = scmp.ne.s32.totalorder %s60, %s63
      %p69 = scmp.eq.s32.totalorder %s12, 0
      %p70 = por %p68, %p69
      %p71 = scmp.ne.s32.totalorder %s60, %s63
      %p72 = scmp.eq.s32.totalorder %s17, 3
      %p73 = por %p71, %p72
      %p74 = scmp.ne.s32.totalorder %s63, %s64
      %p75 = scmp.eq.s32.totalorder %s17, 0
      %p76 = por %p74, %p75
      %p77 = scmp.ne.s32.totalorder %s63, %s64
      %p78 = scmp.eq.s32.totalorder %s18, 3
      %p79 = por %p77, %p78
      %p81 = scmp.ne.s32.totalorder %s64, %s80
      %p82 = scmp.eq.s32.totalorder %s18, 0
      %p83 = por %p81, %p82
      %s84 = ssub.s32 %s19, %s31
      %s85 = ssub.s32 %s20, %s27
      %s86 = sor.u32 %s84, %s85
      %p87 = scmp.eq.s32.totalorder %s86, 0
      %s89 = sadd.s32 %s88, 1
      %s90 = scalar_select %p87, %s88, %s89
      %p93 = pneg %p87
      %p94 = scmp.eq.s32.totalorder %s12, 3
      %p95 = por %p93, %p94
      %p96 = scmp.ne.s32.totalorder %s88, %s91
      %p97 = scmp.eq.s32.totalorder %s12, 0
      %p98 = por %p96, %p97
      %p99 = scmp.ne.s32.totalorder %s88, %s91
      %p100 = scmp.eq.s32.totalorder %s17, 3
      %p101 = por %p99, %p100
      %p102 = scmp.ne.s32.totalorder %s91, %s92
      %p103 = scmp.eq.s32.totalorder %s17, 0
      %p104 = por %p102, %p103
      %p105 = scmp.ne.s32.totalorder %s91, %s92
      %p106 = scmp.eq.s32.totalorder %s18, 3
      %p107 = por %p105, %p106
      %p109 = scmp.ne.s32.totalorder %s92, %s108
      %p110 = scmp.eq.s32.totalorder %s18, 0
      %p111 = por %p109, %p110
      %s112 = ssub.s32 %s19, %s31
      %s113 = ssub.s32 %s20, %s27
      %s114 = sor.u32 %s112, %s113
      %p115 = scmp.eq.s32.totalorder %s114, 0
      %s117 = sadd.s32 %s116, 1
      %s118 = scalar_select %p115, %s116, %s117
      %p121 = pneg %p115
      %p122 = scmp.eq.s32.totalorder %s12, 3
      %p123 = por %p121, %p122
      %p124 = scmp.ne.s32.totalorder %s116, %s119
      %p125 = scmp.eq.s32.totalorder %s12, 0
      %p126 = por %p124, %p125
      %p127 = scmp.ne.s32.totalorder %s116, %s119
      %p128 = scmp.eq.s32.totalorder %s17, 3
      %p129 = por %p127, %p128
      %p130 = scmp.ne.s32.totalorder %s119, %s120
      %p131 = scmp.eq.s32.totalorder %s17, 0
      %p132 = por %p130, %p131
      %p133 = scmp.ne.s32.totalorder %s119, %s120
      %p134 = scmp.eq.s32.totalorder %s18, 3
      %p135 = por %p133, %p134
      %p137 = scmp.ne.s32.totalorder %s120, %s136
      %p138 = scmp.eq.s32.totalorder %s18, 0
      %p139 = por %p137, %p138
      %p140 = scmp.le.s32.totalorder 1, %s12
      %p141 = scmp.lt.s32.totalorder %s12, 5
      %p142 = pnand %p140, %p141
      %p143 = pneg %p142
      // Predicated region
      $region9: #{tpu_custom_call.1} parent=5 // pred_check
        _
      $region10: #{tpu_custom_call.1} parent=5 // pred_check_branch
        %145 = sbr.rel (%p142) target = $region12
      $region11: #{tpu_custom_call.1} parent=5 // pred_region
        %s146 = ssub.s32 %s12, 1
      $region12: #{tpu_custom_call.1} parent=5 // pred_fallthru
        _
      %p147 = scmp.lt.s32.totalorder %s12, 4
      // Predicated region
      $region13: #{tpu_custom_call.1} parent=5 // pred_check
        %p148 = pneg %p147
      $region14: #{tpu_custom_call.1} parent=5 // pred_check_branch
        %150 = sbr.rel (%p148) target = $region16
      $region15: #{tpu_custom_call.1} parent=5 // pred_region
        // Predicated region
        $region17: #{tpu_custom_call.1} parent=15 // pred_check
          %p151 = pneg %p44
        $region18: #{tpu_custom_call.1} parent=15 // pred_check_branch
          %153 = sbr.rel (%p151) target = $region20
        $region19: #{tpu_custom_call.1} parent=15 // pred_region
          %p154 = scmp.lt.s32.totalorder %s20, 127
          %s155 = scalar_select %p154, %s20, 127
          %s156 = smul.addr %s155, 8
          %s157 = scalar_lea.vmem %s0, %s156
        $region20: #{tpu_custom_call.1} parent=15 // pred_fallthru
          _
        // Predicated region
        $region21: #{tpu_custom_call.1} parent=15 // pred_check
          %p158 = pneg %p70
        $region22: #{tpu_custom_call.1} parent=15 // pred_check_branch
          %160 = sbr.rel (%p158) target = $region24
        $region23: #{tpu_custom_call.1} parent=15 // pred_region
          %p161 = scmp.lt.s32.totalorder %s20, 127
          %s162 = scalar_select %p161, %s20, 127
          %s163 = smul.addr %s162, 8
          %s164 = scalar_lea.vmem %s1, %s163
        $region24: #{tpu_custom_call.1} parent=15 // pred_fallthru
          _
        // Predicated region
        $region25: #{tpu_custom_call.1} parent=15 // pred_check
          %p165 = pneg %p98
        $region26: #{tpu_custom_call.1} parent=15 // pred_check_branch
          %167 = sbr.rel (%p165) target = $region28
        $region27: #{tpu_custom_call.1} parent=15 // pred_region
          %p168 = scmp.lt.s32.totalorder %s19, 1
          %s169 = scalar_select %p168, %s19, 1
          %p170 = scmp.lt.s32.totalorder %s20, 1
          %s171 = scalar_select %p170, %s20, 1
          %s172 = smul.addr %s169, 2
          %s173 = sadd.s32 %s171, %s172
          %s174 = smul.addr %s173, 8
          %s175 = scalar_lea.vmem %s2, %s174
        $region28: #{tpu_custom_call.1} parent=15 // pred_fallthru
          _
      $region16: #{tpu_custom_call.1} parent=5 // pred_fallthru
        _
      %p176 = scmp.le.s32.totalorder 1, %s12
      %p177 = scmp.lt.s32.totalorder %s12, 5
      %p178 = pnand %p176, %p177
      %p179 = pneg %p178
      // Predicated region
      $region29: #{tpu_custom_call.1} parent=5 // pred_check
        _
      $region30: #{tpu_custom_call.1} parent=5 // pred_check_branch
        %181 = sbr.rel (%p178) target = $region32
      $region31: #{tpu_custom_call.1} parent=5 // pred_region
        %s182 = ssub.s32 %s12, 1
        %p183 = scmp.lt.s32.totalorder %s22, 127
        %s184 = scalar_select %p183, %s22, 127
        %s185 = smul.addr %s184, 8
        %s186 = scalar_lea.vmem %s0, %s185
        %p187 = pneg %p50
        %p188 = pneg %p47
        %p189 = scmp.lt.s32.totalorder %s22, 127
        %s190 = scalar_select %p189, %s22, 127
        %s191 = smul.addr %s190, 8
        %s192 = scalar_lea.vmem %s1, %s191
        %p193 = pneg %p76
        %p194 = pneg %p73
        %p195 = scmp.lt.s32.totalorder %s21, 1
        %s196 = scalar_select %p195, %s21, 1
        %p197 = scmp.lt.s32.totalorder %s22, 1
        %s198 = scalar_select %p197, %s22, 1
        %s199 = smul.addr %s196, 2
        %s200 = sadd.s32 %s198, %s199
        %s201 = smul.addr %s200, 8
        %s202 = scalar_lea.vmem %s2, %s201
        %p203 = pneg %p104
        %p204 = pneg %p101
        %p205 = pneg %p132
        %p206 = pneg %p129
        %s207 = sand.u32 %s119, 1
        %s208 = scalar_lea.sflag [#allocation3], %s207
        %s209 = sand.u32 %s119, 1
        %s210 = smul.addr %s209, 8
        %s211 = scalar_lea.vmem [#allocation2], %s210
        %p212 = scmp.lt.s32.totalorder %s22, 127
        %s213 = scalar_select %p212, %s22, 127
        %s214 = smul.addr %s213, 8
        %s215 = scalar_lea.vmem %s0, %s214
        %p216 = scmp.lt.s32.totalorder %s22, 127
        %s217 = scalar_select %p216, %s22, 127
        %s218 = smul.addr %s217, 8
        %s219 = scalar_lea.vmem %s1, %s218
        %p220 = scmp.lt.s32.totalorder %s21, 1
        %s221 = scalar_select %p220, %s21, 1
        %p222 = scmp.lt.s32.totalorder %s22, 1
        %s223 = scalar_select %p222, %s22, 1
        %s224 = smul.addr %s221, 2
        %s225 = sadd.s32 %s223, %s224
        %s226 = smul.addr %s225, 8
        %s227 = scalar_lea.vmem %s2, %s226
        %v228 = vld [vmem:[%s227] sm:$0xff]
        %230 = vrot.lane.b32.xlu0 %v228, 80
        %v231 = vpop.permute.xlu0 %230
        %233 = vrot.lane.b32.xlu0 %v228, 48
        %v234 = vpop.permute.xlu0 %233
        %vm236 = vcmask 392192
        %v237 = vsel %vm236, %v231, %v234
        %v238 = vld [vmem:[%s215] sm:$0xff]
        %v239 = vld [vmem:[%s219] sm:$0xff]
        %v240 = vmul.f32 %v228, %v238
        %v241 = vmul.f32 %v237, %v239
        %v242 = vadd.f32 %v240, %v241
        %vm243 = vcmask 785408
        %244 = vst.msk [vmem:[%s211] sm:$0xff] %vm243, %v242
        %s245 = sand.u32 %s119, 1
        %s246 = scalar_lea.sflag [#allocation3], %s245
        %s247 = sand.u32 %s119, 1
        %s248 = smul.addr %s247, 8
        %s249 = scalar_lea.vmem [#allocation2], %s248
        // Predicated region
        $region33: #{tpu_custom_call.1} parent=31 // pred_check
          %p250 = pneg %p129
        $region34: #{tpu_custom_call.1} parent=31 // pred_check_branch
          %252 = sbr.rel (%p250) target = $region36
        $region35: #{tpu_custom_call.1} parent=31 // pred_region
          %s254 = ssub.s32 128, 128
          %255 = vsyncadd %s246, %s254
          %s256 = smul.addr %s21, 2
          %s257 = sadd.s32 %s22, %s256
          %s258 = smul.addr %s257, 128
          %s259 = scalar_lea.hbm %s3, %s258
          %s261 = sshll.u32 %s249, 4
          %s262 = int_to_ptr.vmem [resolvable:$true] %s261
          %264 = dma.vmem_to_hbm [thread:$0]  %s262, 128, %s259, %s246
        $region36: #{tpu_custom_call.1} parent=31 // pred_fallthru
          _
      $region32: #{tpu_custom_call.1} parent=5 // pred_fallthru
        _
      %p265 = scmp.le.s32.totalorder 2, %s12
      // Predicated region
      $region37: #{tpu_custom_call.1} parent=5 // pred_check
        %p266 = pneg %p265
      $region38: #{tpu_custom_call.1} parent=5 // pred_check_branch
        %268 = sbr.rel (%p266) target = $region40
      $region39: #{tpu_custom_call.1} parent=5 // pred_region
        %s269 = ssub.s32 %s12, 2
        // Predicated region
        $region41: #{tpu_custom_call.1} parent=39 // pred_check
          %p270 = pneg %p135
        $region42: #{tpu_custom_call.1} parent=39 // pred_check_branch
          %272 = sbr.rel (%p270) target = $region44
        $region43: #{tpu_custom_call.1} parent=39 // pred_region
          %s273 = sand.u32 %s120, 1
          %s274 = scalar_lea.sflag [#allocation3], %s273
          %s275 = sand.u32 %s120, 1
          %s276 = smul.addr %s275, 8
          %s277 = scalar_lea.vmem [#allocation2], %s276
          %278 = dma.done %s274, 128
        $region44: #{tpu_custom_call.1} parent=39 // pred_fallthru
          _
      $region40: #{tpu_custom_call.1} parent=5 // pred_fallthru
        _
    $region6: #{tpu_custom_call.1} parent=1 // loop_footer
      %s16 = sadd.s32 1, %s12
    $region7: #{tpu_custom_call.1} parent=1 // loop_footer_branch
      %11 = sbr.rel target = $region3
    $region8: #{tpu_custom_call.1} parent=1 // loop_exit
      _
    %279 = vsyncpa [#allocation3], 1
    %s280 = scalar_lea.sflag [#allocation3], 1
    %281 = vsyncpa %s280, 1

</llo_original>
